<compile_context>
chip_gen: v5e
topology: v5e:2x2
jax: 0.10.0
libtpu: 0.0.40
codegen_flags: <defaults>
</compile_context>

<pallas_src>
import functools

import jax
import jax.numpy as jnp
from jax.experimental import pallas as pl
from jax.experimental.pallas import tpu as pltpu


def _round_up(x, m):
    return ((x + m - 1) // m) * m


def _im2col(x, k, stride):
    """NCHW -> (B, OH*OW, C*k*k) patches for a k x k, stride-`stride`, valid conv."""
    B, C, H, W = x.shape
    OH = (H - k) // stride + 1
    OW = (W - k) // stride + 1
    cols = []
    for i in range(k):
        for j in range(k):
            cols.append(x[:, :, i:i + stride * OH:stride, j:j + stride * OW:stride])
    p = jnp.stack(cols, axis=-1)            # (B, C, OH, OW, k*k)
    p = p.transpose(0, 2, 3, 1, 4)          # (B, OH, OW, C, k*k)
    return p.reshape(B, OH * OW, C * k * k)


def _stem_gap_kernel(patches_ref, w_stem_ref, pooled_ref, acc_ref, *, S):
    """Stem conv (bf16 MXU) + ReLU + running global-average-pool sum."""
    s_id = pl.program_id(1)

    # ---- init the (8, C1_pad) partial-sum accumulator at the first tile ----
    @pl.when(s_id == 0)
    def _init():
        acc_ref[...] = jnp.zeros_like(acc_ref)

    # ---- stem conv as bf16 MXU matmul with fused ReLU ----
    stem = jnp.dot(patches_ref[0], w_stem_ref[...],
                   preferred_element_type=jnp.float32)      # (TILE_S, C1_pad) f32
    stem = jnp.maximum(stem, 0.0)

    # ---- running spatial sum as 8 sublane partial sums (VPU adds only) ----
    acc_ref[...] += stem.reshape(-1, 8, acc_ref.shape[-1]).sum(axis=0)

    # ---- finalize: one cross-sublane reduce + 1/S scale ----
    @pl.when(s_id == pl.num_programs(1) - 1)
    def _finalize():
        # Padded spatial rows are exactly zero (no stem bias/BN), so summing
        # over S_pad rows and dividing by the true S is exact.
        pooled_ref[0] = (jnp.sum(acc_ref[...], axis=0, keepdims=True)
                         * jnp.float32(1.0 / S))


def _head_kernel(pooled_ref, w_proj_ref, w_fc_ref, b_fc_ref, u_ref, out_ref,
                 *, drop_p):
    """Batched head: pooled -> proj(2048) -> ReLU -> fc -> +b -> ReLU -> Dropout."""
    feat = jnp.dot(pooled_ref[...].astype(jnp.bfloat16), w_proj_ref[...],
                   preferred_element_type=jnp.float32)      # (B, 2048)
    feat = jnp.maximum(feat, 0.0)
    logits = jnp.dot(feat.astype(jnp.bfloat16), w_fc_ref[...],
                     preferred_element_type=jnp.float32)    # (B, E_pad)
    logits = logits + b_fc_ref[...]
    act = jnp.maximum(logits, 0.0)                          # ReLU
    if drop_p > 0.0:
        # keep with prob (1-p); mask threshold matches the 1/(1-p) scale.
        keep = u_ref[...] >= jnp.float32(drop_p)
        act = jnp.where(keep, act * jnp.float32(1.0 / (1.0 - drop_p)), 0.0)
    out_ref[...] = act.astype(out_ref.dtype)


def encoder_cnn_forward(images, params, key, drop_p=0.5):
    """images: (B, C, H, W) float32 NCHW.  Returns (B, embed_size) float32."""
    if not (0.0 <= drop_p < 1.0):
        raise ValueError("drop_p must be in [0, 1); pass drop_p=0.0 for eval mode")

    w_stem, w_proj, w_fc, b_fc = params
    B, C, H, W = images.shape
    k, stride = 3, 2
    OH = (H - k) // stride + 1
    OW = (W - k) // stride + 1
    S = OH * OW

    K = C * k * k
    C1 = w_stem.shape[1]
    F = w_proj.shape[1]
    E = w_fc.shape[1]

    # Padding: contraction dim only to 32 (NOT 128) to keep streamed patch
    # bytes small; lane dims to 128 for lane-dense MXU/store shapes.
    K_align = _round_up(K, 32)
    C1_pad = _round_up(C1, 128)
    E_pad = _round_up(E, 128)

    # Big spatial tiles: single step for small S, 4096-row tiles otherwise.
    MAX_TILE_S = 4096
    TILE_S = _round_up(S, 8) if S <= MAX_TILE_S else MAX_TILE_S
    S_pad = _round_up(S, TILE_S)

    # wrapper-side im2col, zero-padded, emitted in bf16 (halves HBM traffic)
    patches = _im2col(images.astype(jnp.float32), k, stride)          # (B, S, K)
    patches = jnp.pad(patches, ((0, 0), (0, S_pad - S), (0, K_align - K)))
    patches = patches.astype(jnp.bfloat16)

    w_stem_p = jnp.pad(w_stem, ((0, K_align - K), (0, C1_pad - C1))).astype(jnp.bfloat16)
    w_proj_p = jnp.pad(w_proj, ((0, C1_pad - C1), (0, 0))).astype(jnp.bfloat16)
    w_fc_p = jnp.pad(w_fc, ((0, 0), (0, E_pad - E))).astype(jnp.bfloat16)
    b_fc_p = jnp.pad(b_fc.reshape(1, -1), ((0, 0), (0, E_pad - E))).astype(jnp.float32)

    # ---- kernel 1: stem conv + ReLU + global average pool (gridded) --------
    grid = (B, S_pad // TILE_S)
    pooled = pl.pallas_call(
        functools.partial(_stem_gap_kernel, S=S),
        out_shape=jax.ShapeDtypeStruct((B, 1, C1_pad), jnp.float32),
        grid_spec=pltpu.PrefetchScalarGridSpec(
            num_scalar_prefetch=0,
            grid=grid,
            in_specs=[
                # streamed, contiguous patch tiles (double-buffered by Pallas)
                pl.BlockSpec((1, TILE_S, K_align), lambda b, s: (b, s, 0)),
                # VMEM-resident stem weights (same block every step)
                pl.BlockSpec((K_align, C1_pad), lambda b, s: (0, 0)),
            ],
            out_specs=pl.BlockSpec((1, 1, C1_pad), lambda b, s: (b, 0, 0)),
            # (8, C1_pad) partial-sum GAP accumulator
            scratch_shapes=[pltpu.VMEM((8, C1_pad), jnp.float32)],
        ),
        compiler_params=pltpu.CompilerParams(
            dimension_semantics=("parallel", "arbitrary"),
            vmem_limit_bytes=32 * 1024 * 1024,
        ),
    )(patches, w_stem_p)

    # ---- kernel 2: batched head (single shot, whole arrays in VMEM) --------
    u = jax.random.uniform(key, (B, E_pad), jnp.float32)   # dropout randoms
    out = pl.pallas_call(
        functools.partial(_head_kernel, drop_p=drop_p),
        out_shape=jax.ShapeDtypeStruct((B, E_pad), jnp.float32),
    )(pooled.reshape(B, C1_pad), w_proj_p, w_fc_p, b_fc_p, u)

    return out[:, :E]


def make_params(key, in_channels, embed_size):
    """Deterministic synthetic parameters (shapes implied by the module __init__)."""
    C1 = 32                 # surrogate stem channels
    F = 2048                # inception_v3 fc.in_features
    K = in_channels * 3 * 3
    k1, k2, k3 = jax.random.split(key, 3)
    w_stem = jax.random.normal(k1, (K, C1), jnp.float32) * 0.1
    w_proj = jax.random.normal(k2, (C1, F), jnp.float32) * 0.05
    w_fc = jax.random.normal(k3, (F, embed_size), jnp.float32) * 0.02
    b_fc = jnp.zeros((embed_size,), jnp.float32)
    return w_stem, w_proj, w_fc, b_fc


if __name__ == "__main__":
    key = jax.random.PRNGKey(0)
    k_img, k_par, k_drop = jax.random.split(key, 3)

    B, C, H, W = 2, 3, 16, 16
    embed_size = 32

    images = jax.random.normal(k_img, (B, C, H, W), jnp.float32)
    params = make_params(k_par, C, embed_size)

    out = encoder_cnn_forward(images, params, k_drop, drop_p=0.5)
    jax.block_until_ready(out)
    assert out.shape == (B, embed_size) and out.dtype == jnp.float32
    print("KERNEL_OK")
</pallas_src>

<mosaic_0001>
module attributes {stable_mosaic.version = 11 : i64} {
  func.func @_stem_gap_kernel(%arg0: i32, %arg1: i32, %arg2: memref<1x56x32xbf16, #tpu.memory_space<vmem>>, %arg3: memref<32x128xbf16, #tpu.memory_space<vmem>>, %arg4: memref<1x1x128xf32, #tpu.memory_space<vmem>>, %arg5: memref<8x128xf32, #tpu.memory_space<vmem>>) attributes {dimension_semantics = [#tpu.dimension_semantics<parallel>, #tpu.dimension_semantics<arbitrary>], iteration_bounds = array<i64: 2, 1>, scalar_prefetch = 0 : i64, scratch_operands = 1 : i64, tpu.core_type = #tpu.core_type<tc>, window_params = [{transform_indices = @transform_0, window_bounds = array<i64: 1, 56, 32>}, {pipeline_mode = #tpu.pipeline_mode<synchronous>, transform_indices = @transform_1, window_bounds = array<i64: 32, 128>}, {transform_indices = @transform_2, window_bounds = array<i64: 1, 1, 128>}]} {
    %c0_i32 = arith.constant 0 : i32
    %0 = arith.cmpi eq, %arg1, %c0_i32 : i32
    %1 = arith.extui %0 : i1 to i32
    %c0_i32_0 = arith.constant 0 : i32
    %2 = arith.cmpi ne, %1, %c0_i32_0 : i32
    scf.if %2 {
      %cst_13 = arith.constant 0.000000e+00 : f32
      %17 = vector.broadcast %cst_13 : f32 to vector<8x128xf32>
      %c0_14 = arith.constant 0 : index
      %c0_15 = arith.constant 0 : index
      %18 = vector.load %arg5[%c0_14, %c0_15] : memref<8x128xf32, #tpu.memory_space<vmem>>, vector<8x128xf32>
      tpu.vector_store %arg5[%c0_14, %c0_15], %17 {strides = array<i32>} : memref<8x128xf32, #tpu.memory_space<vmem>>, vector<8x128xf32>,
    } else {
    }
    %c0 = arith.constant 0 : index
    %c0_1 = arith.constant 0 : index
    %c0_2 = arith.constant 0 : index
    %3 = vector.load %arg2[%c0, %c0_1, %c0_2] : memref<1x56x32xbf16, #tpu.memory_space<vmem>>, vector<1x56x32xbf16>
    %4 = vector.shape_cast %3 : vector<1x56x32xbf16> to vector<56x32xbf16>
    %c0_3 = arith.constant 0 : index
    %c0_4 = arith.constant 0 : index
    %5 = vector.load %arg3[%c0_3, %c0_4] : memref<32x128xbf16, #tpu.memory_space<vmem>>, vector<32x128xbf16>
    %cst = arith.constant dense<0.000000e+00> : vector<56x128xf32>
    %6 = tpu.matmul %4, %5, %cst {dimension_numbers = #tpu.dot_dimension_numbers<[1], [0], [0], [1], [0, 0, 1, 1], [], []>} : vector<56x32xbf16>, vector<32x128xbf16>, vector<56x128xf32> -> vector<56x128xf32>
    %cst_5 = arith.constant 0.000000e+00 : f32
    %7 = vector.broadcast %cst_5 : f32 to vector<56x128xf32>
    %8 = arith.maximumf %6, %7 : vector<56x128xf32>
    %c0_6 = arith.constant 0 : index
    %c0_7 = arith.constant 0 : index
    %9 = vector.load %arg5[%c0_6, %c0_7] : memref<8x128xf32, #tpu.memory_space<vmem>>, vector<8x128xf32>
    %10 = vector.shape_cast %8 : vector<56x128xf32> to vector<7x8x128xf32>
    %cst_8 = arith.constant dense<0.000000e+00> : vector<8x128xf32>
    %11 = vector.multi_reduction <add>, %10, %cst_8 [0] : vector<7x8x128xf32> to vector<8x128xf32>
    %12 = arith.addf %9, %11 : vector<8x128xf32>
    %c0_9 = arith.constant 0 : index
    %c0_10 = arith.constant 0 : index
    %13 = vector.load %arg5[%c0_9, %c0_10] : memref<8x128xf32, #tpu.memory_space<vmem>>, vector<8x128xf32>
    tpu.vector_store %arg5[%c0_9, %c0_10], %12 {strides = array<i32>} : memref<8x128xf32, #tpu.memory_space<vmem>>, vector<8x128xf32>,
    %c0_i32_11 = arith.constant 0 : i32
    %14 = arith.cmpi eq, %arg1, %c0_i32_11 : i32
    %15 = arith.extui %14 : i1 to i32
    %c0_i32_12 = arith.constant 0 : i32
    %16 = arith.cmpi ne, %15, %c0_i32_12 : i32
    scf.if %16 {
      %c0_13 = arith.constant 0 : index
      %c0_14 = arith.constant 0 : index
      %17 = vector.load %arg5[%c0_13, %c0_14] : memref<8x128xf32, #tpu.memory_space<vmem>>, vector<8x128xf32>
      %cst_15 = arith.constant dense<0.000000e+00> : vector<128xf32>
      %18 = vector.multi_reduction <add>, %17, %cst_15 [0] : vector<8x128xf32> to vector<128xf32>
      %19 = vector.shape_cast %18 : vector<128xf32> to vector<1x128xf32>
      %cst_16 = arith.constant 0.0204081628 : f32
      %20 = vector.broadcast %cst_16 : f32 to vector<1x128xf32>
      %21 = arith.mulf %19, %20 : vector<1x128xf32>
      %c0_17 = arith.constant 0 : index
      %c0_18 = arith.constant 0 : index
      %c0_19 = arith.constant 0 : index
      %22 = vector.load %arg4[%c0_17, %c0_18, %c0_19] : memref<1x1x128xf32, #tpu.memory_space<vmem>>, vector<1x1x128xf32>
      %23 = vector.shape_cast %22 : vector<1x1x128xf32> to vector<1x128xf32>
      %24 = vector.shape_cast %21 : vector<1x128xf32> to vector<1x1x128xf32>
      tpu.vector_store %arg4[%c0_17, %c0_18, %c0_19], %24 {strides = array<i32>} : memref<1x1x128xf32, #tpu.memory_space<vmem>>, vector<1x1x128xf32>,
    } else {
    }
    return
  }
  func.func @transform_0(%arg0: i32, %arg1: i32) -> (i32, i32, i32) {
    %c0_i32 = arith.constant 0 : i32
    %c0_i32_0 = arith.constant 0 : i32
    return %arg0, %arg1, %c0_i32 : i32, i32, i32
  }
  func.func @transform_1(%arg0: i32, %arg1: i32) -> (i32, i32) {
    %c0_i32 = arith.constant 0 : i32
    %c0_i32_0 = arith.constant 0 : i32
    %c0_i32_1 = arith.constant 0 : i32
    return %c0_i32, %c0_i32_0 : i32, i32
  }
  func.func @transform_2(%arg0: i32, %arg1: i32) -> (i32, i32, i32) {
    %c0_i32 = arith.constant 0 : i32
    %c0_i32_0 = arith.constant 0 : i32
    %c0_i32_1 = arith.constant 0 : i32
    return %arg0, %c0_i32, %c0_i32_0 : i32, i32, i32
  }
}

</mosaic_0001>

<llo_original>
// kernel: tpu_custom_call.1
$region0: #{tpu_custom_call.1}
  #allocation0 [shape = 'u32[]', space=smem, size = 0x4, offset = 0x4, fixed_abs, tag = 'smem constant byte address 0x4 - core index']
  #allocation1 [shape = 'u32[72,128]{1,0:T(1,128)}', space=vmem, size = 0x9000, scoped, tag = 'internal scratch']
  #allocation2 [shape = 'f32[8,128]{1,0:T(8,128)}', space=vmem, size = 0x1000, scoped, tag = 'scratch operand']
  %s0 = inlined_call_operand.vmem [shape: bf16[2,56,32], index: 0, kind: input, shape index: {}]
  %s1 = inlined_call_operand.vmem [shape: bf16[32,128], index: 1, kind: input, shape index: {}]
  %s2 = inlined_call_operand.hbm [shape: f32[2,1,128], index: 2, kind: output, shape index: {}]
  %s3 = sld [smem:[#allocation0]]
  $region49: #{tpu_custom_call.1} parent=0
    _
  %s5 = ssub.s32 1, %s3
  %s6 = scalar_select 0, %s5, %s3
  $region1: #{tpu_custom_call.1} parent=0
    #allocation3 [shape = 'u8[1024]{0}', space=vmem, size = 0x400, scoped, tag = 'output window, operand 0']
    #allocation4 [shape = 's32[2]{0}', space=sflag, size = 0x8, scoped, tag = 'scoped memory for tpu_custom_call.1']
    %7 = vsyncpa [#allocation4], 0
    %s8 = scalar_lea.sflag [#allocation4], 1
    %9 = vsyncpa %s8, 0
    loop: start=0, step=1, limit=4
    $region2: #{tpu_custom_call.1} parent=1 // loop_pre_header
      _
    $region3: #{tpu_custom_call.1} parent=1 // loop_header
      %s11 = sphi 0, %s15
      %p12 = scmp.ge.s32.totalorder %s11, 4
      %s18 = sphi 0, %s30
      %s19 = sphi 0, %s26
      %s20 = sphi 0, %s18
      %s21 = sphi 0, %s19
      %s22 = sphi 0, %s20
      %s23 = sphi 0, %s21
      %s35 = sphi 0, %s37
      %s38 = sphi 0, %s35
      %s39 = sphi 0, %s38
      %s55 = sphi 0, %s39
      %s59 = sphi 0, %s59
      %s61 = sphi 0, %s59
      %s62 = sphi 0, %s61
      %s76 = sphi 0, %s62
      %s82 = sphi 0, %s84
      %s85 = sphi 0, %s82
      %s86 = sphi 0, %s85
      %s102 = sphi 0, %s86
    $region4: #{tpu_custom_call.1} parent=1 // loop_header_branch
      %14 = sbr.rel (%p12) target = $region8
    $region5: #{tpu_custom_call.1} parent=1 // loop_body
      %s16 = ssub.s32 %s11, 1
      %s17 = ssub.s32 %s11, 2
      %s24 = sadd.s32 1, %s19
      %p25 = scmp.ge.s32.totalorder %s24, 1
      %s26 = scalar_select %p25, 0, %s24
      %s27 = sadd.s32 1, %s18
      %s28 = scalar_select %p25, %s27, %s18
      %p29 = scmp.ge.s32.totalorder %s28, 2
      %s30 = scalar_select %p29, 0, %s28
      %s31 = ssub.s32 %s18, %s30
      %s32 = ssub.s32 %s19, %s26
      %s33 = sor.u32 %s31, %s32
      %p34 = scmp.eq.s32.totalorder %s33, 0
      %s36 = sadd.s32 %s35, 1
      %s37 = scalar_select %p34, %s35, %s36
      %p40 = pneg %p34
      %p41 = scmp.eq.s32.totalorder %s11, 1
      %p42 = por %p40, %p41
      %p43 = scmp.ne.s32.totalorder %s35, %s38
      %p44 = scmp.eq.s32.totalorder %s11, 0
      %p45 = por %p43, %p44
      %p46 = scmp.ne.s32.totalorder %s35, %s38
      %p47 = scmp.eq.s32.totalorder %s16, 1
      %p48 = por %p46, %p47
      %p49 = scmp.ne.s32.totalorder %s38, %s39
      %p50 = scmp.eq.s32.totalorder %s16, 0
      %p51 = por %p49, %p50
      %p52 = scmp.ne.s32.totalorder %s38, %s39
      %p53 = scmp.eq.s32.totalorder %s17, 1
      %p54 = por %p52, %p53
      %p56 = scmp.ne.s32.totalorder %s39, %s55
      %p57 = scmp.eq.s32.totalorder %s17, 0
      %p58 = por %p56, %p57
      %s60 = sadd.s32 %s59, 1
      %p63 = scmp.eq.s32.totalorder %s11, 1
      %p64 = scmp.ne.s32.totalorder %s59, %s61
      %p65 = scmp.eq.s32.totalorder %s11, 0
      %p66 = por %p64, %p65
      %p67 = scmp.ne.s32.totalorder %s59, %s61
      %p68 = scmp.eq.s32.totalorder %s16, 1
      %p69 = por %p67, %p68
      %p70 = scmp.ne.s32.totalorder %s61, %s62
      %p71 = scmp.eq.s32.totalorder %s16, 0
      %p72 = por %p70, %p71
      %p73 = scmp.ne.s32.totalorder %s61, %s62
      %p74 = scmp.eq.s32.totalorder %s17, 1
      %p75 = por %p73, %p74
      %p77 = scmp.ne.s32.totalorder %s62, %s76
      %p78 = scmp.eq.s32.totalorder %s17, 0
      %p79 = por %p77, %p78
      %s80 = ssub.s32 %s18, %s30
      %p81 = scmp.eq.s32.totalorder %s80, 0
      %s83 = sadd.s32 %s82, 1
      %s84 = scalar_select %p81, %s82, %s83
      %p87 = pneg %p81
      %p88 = scmp.eq.s32.totalorder %s11, 1
      %p89 = por %p87, %p88
      %p90 = scmp.ne.s32.totalorder %s82, %s85
      %p91 = scmp.eq.s32.totalorder %s11, 0
      %p92 = por %p90, %p91
      %p93 = scmp.ne.s32.totalorder %s82, %s85
      %p94 = scmp.eq.s32.totalorder %s16, 1
      %p95 = por %p93, %p94
      %p96 = scmp.ne.s32.totalorder %s85, %s86
      %p97 = scmp.eq.s32.totalorder %s16, 0
      %p98 = por %p96, %p97
      %p99 = scmp.ne.s32.totalorder %s85, %s86
      %p100 = scmp.eq.s32.totalorder %s17, 1
      %p101 = por %p99, %p100
      %p103 = scmp.ne.s32.totalorder %s86, %s102
      %p104 = scmp.eq.s32.totalorder %s17, 0
      %p105 = por %p103, %p104
      %p106 = scmp.le.s32.totalorder 1, %s11
      %p107 = scmp.lt.s32.totalorder %s11, 3
      %p108 = pnand %p106, %p107
      %p109 = pneg %p108
      // Predicated region
      $region9: #{tpu_custom_call.1} parent=5 // pred_check
        _
      $region10: #{tpu_custom_call.1} parent=5 // pred_check_branch
        %111 = sbr.rel (%p108) target = $region12
      $region11: #{tpu_custom_call.1} parent=5 // pred_region
        %s112 = ssub.s32 %s11, 1
        // Predicated region
        $region13: #{tpu_custom_call.1} parent=11 // pred_check
          %p113 = pneg %p72
        $region14: #{tpu_custom_call.1} parent=11 // pred_check_branch
          %115 = sbr.rel (%p113) target = $region16
        $region15: #{tpu_custom_call.1} parent=11 // pred_region
          _
        $region16: #{tpu_custom_call.1} parent=11 // pred_fallthru
          _
      $region12: #{tpu_custom_call.1} parent=5 // pred_fallthru
        _
      %p116 = scmp.lt.s32.totalorder %s11, 2
      // Predicated region
      $region17: #{tpu_custom_call.1} parent=5 // pred_check
        %p117 = pneg %p116
      $region18: #{tpu_custom_call.1} parent=5 // pred_check_branch
        %119 = sbr.rel (%p117) target = $region20
      $region19: #{tpu_custom_call.1} parent=5 // pred_region
        // Predicated region
        $region21: #{tpu_custom_call.1} parent=19 // pred_check
          %p120 = pneg %p45
        $region22: #{tpu_custom_call.1} parent=19 // pred_check_branch
          %122 = sbr.rel (%p120) target = $region24
        $region23: #{tpu_custom_call.1} parent=19 // pred_region
          %s123 = smul.u32 7, %s19
          %p124 = scmp.lt.s32.totalorder %s18, 1
          %s125 = scalar_select %p124, %s18, 1
          %p126 = scmp.lt.s32.totalorder %s123, 6
          %s127 = scalar_select %p126, %s123, 6
          %s128 = smul.addr %s125, 7
          %s129 = sadd.s32 %s127, %s128
          %s130 = smul.addr %s129, 4
          %s131 = scalar_lea.vmem %s0, %s130
          %s132 = smul.u32 7, %s19
        $region24: #{tpu_custom_call.1} parent=19 // pred_fallthru
          _
      $region20: #{tpu_custom_call.1} parent=5 // pred_fallthru
        _
      %p133 = scmp.le.s32.totalorder 1, %s11
      %p134 = scmp.lt.s32.totalorder %s11, 3
      %p135 = pnand %p133, %p134
      %p136 = pneg %p135
      // Predicated region
      $region25: #{tpu_custom_call.1} parent=5 // pred_check
        _
      $region26: #{tpu_custom_call.1} parent=5 // pred_check_branch
        %138 = sbr.rel (%p135) target = $region28
      $region27: #{tpu_custom_call.1} parent=5 // pred_region
        %s139 = ssub.s32 %s11, 1
        %s140 = smul.u32 7, %s21
        %p141 = scmp.lt.s32.totalorder %s20, 1
        %s142 = scalar_select %p141, %s20, 1
        %p143 = scmp.lt.s32.totalorder %s140, 6
        %s144 = scalar_select %p143, %s140, 6
        %s145 = smul.addr %s142, 7
        %s146 = sadd.s32 %s144, %s145
        %s147 = smul.addr %s146, 4
        %s148 = scalar_lea.vmem %s0, %s147
        %p149 = pneg %p51
        %p150 = pneg %p48
        %p151 = pneg %p72
        %p152 = pneg %p69
        %p153 = pneg %p98
        %p154 = pneg %p95
        %s155 = sand.u32 %s85, 1
        %s156 = scalar_lea.sflag [#allocation4], %s155
        %s157 = sand.u32 %s85, 1
        %s158 = scalar_lea.vmem [#allocation3], %s157
        %s159 = smul.u32 7, %s21
        %p160 = scmp.lt.s32.totalorder %s20, 1
        %s161 = scalar_select %p160, %s20, 1
        %p162 = scmp.lt.s32.totalorder %s159, 6
        %s163 = scalar_select %p162, %s159, 6
        %s164 = smul.addr %s161, 7
        %s165 = sadd.s32 %s163, %s164
        %s166 = smul.addr %s165, 4
        %s167 = scalar_lea.vmem %s0, %s166
        %s168 = smul.u32 7, %s21
        %p170 = scmp.eq.s32.totalorder %s21, 0
        // Predicated region
        $region29: #{tpu_custom_call.1} parent=27 // pred_check
          %p171 = pneg %p170
        $region30: #{tpu_custom_call.1} parent=27 // pred_check_branch
          %173 = sbr.rel (%p171) target = $region32
        $region31: #{tpu_custom_call.1} parent=27 // pred_region
          %174 = vst [vmem:[#allocation2] sm:$0xff] 0.0
        $region32: #{tpu_custom_call.1} parent=27 // pred_fallthru
          _
        %v175 = vld [vmem:[%s167] sm:$0xf]
        %v176 = vld [vmem:[%s167 + $0x4] sm:$0xf]
        %v177 = vld [vmem:[%s167 + $0x8] sm:$0xf]
        %v178 = vld [vmem:[%s167 + $0xc] sm:$0xf]
        %v179 = vld [vmem:[%s167 + $0x10] sm:$0xf]
        %v180 = vld [vmem:[%s167 + $0x14] sm:$0xf]
        %v181 = vld [vmem:[%s167 + $0x18] sm:$0xf]
        %v182 = vld [vmem:[%s1] sm:$0xf]
        %v183 = vld [vmem:[%s1 + $0x4] sm:$0xf]
        %v184 = vld [vmem:[%s1 + $0x8] sm:$0xf]
        %v185 = vld [vmem:[%s1 + $0xc] sm:$0xf]
        %v193 = vunpack.c.l.b16 %v175
        %v194 = vunpack.c.l.b16 %v176
        %v195 = vunpack.c.l.b16 %v177
        %v196 = vunpack.c.l.b16 %v178
        %v197 = vunpack.c.l.b16 %v179
        %v198 = vunpack.c.l.b16 %v180
        %v199 = vunpack.c.l.b16 %v181
        %v200 = vpack.c.b16 %v194, %v193
        %v201 = vpack.c.b16 %v196, %v195
        %v202 = vpack.c.b16 %v198, %v197
        %v203 = vpack.c.b16 %v199, %v199
        %v208 = vunpack.c.l.b16 %v182
        %v209 = vunpack.c.l.b16 %v183
        %v210 = vunpack.c.l.b16 %v184
        %v211 = vunpack.c.l.b16 %v185
        %v212 = vpack.c.b16 %v209, %v208
        %v213 = vpack.c.b16 %v211, %v210
        %vm216 = vcmask 261120
        %v218 = vsel %vm216, %v200, 0
        %v221 = vsel %vm216, %v201, 0
        %v224 = vsel %vm216, %v202, 0
        %v227 = vsel %vm216, %v203, 0
        %229 = vmatpush.bf16.msra.mxu0 0
        %230 = vmatpush.bf16.msra.mxu0 0
        %231 = vmatpush.bf16.msra.mxu0 0
        %232 = vmatpush.bf16.msra.mxu0 0
        %233 = vmatpush.bf16.msra.mxu0 0
        %234 = vmatpush.bf16.msra.mxu0 0
        %235 = vmatpush.bf16.msra.mxu0 %v213
        %236 = vmatpush.bf16.msra.mxu0 %v212
        %237 = vmatmul.bf16.gmra.mxu0 %v218
        %v238 = vpop.f32.mrf.mxu0
        %v239 = vadd.f32 0.0, %v238
        %v240 = vpop.f32.mrf.mxu0
        %v241 = vadd.f32 0.0, %v240
        %242 = vmatmul.bf16.gmra.mxu0 %v221
        %v243 = vpop.f32.mrf.mxu0
        %v244 = vadd.f32 0.0, %v243
        %v245 = vpop.f32.mrf.mxu0
        %v246 = vadd.f32 0.0, %v245
        %247 = vmatmul.bf16.gmra.mxu0 %v224
        %v248 = vpop.f32.mrf.mxu0
        %v249 = vadd.f32 0.0, %v248
        %v250 = vpop.f32.mrf.mxu0
        %v251 = vadd.f32 0.0, %v250
        %252 = vmatmul.bf16.gmra.mxu0 %v227
        %v253 = vpop.f32.mrf.mxu0
        %v254 = vadd.f32 0.0, %v253
        %v255 = vpop.f32.mrf.mxu0
        %256 = vdwg.mxu0
        %v257 = vmax.f32 %v239, 0.0
        %v258 = vmax.f32 %v241, 0.0
        %v259 = vmax.f32 %v244, 0.0
        %v260 = vmax.f32 %v246, 0.0
        %v261 = vmax.f32 %v249, 0.0
        %v262 = vmax.f32 %v251, 0.0
        %v263 = vmax.f32 %v254, 0.0
        %v264 = vld [vmem:[#allocation2] sm:$0xff]
        %v265 = vadd.f32 %v257, %v258
        %v266 = vadd.f32 %v265, %v259
        %v267 = vadd.f32 %v266, %v260
        %v268 = vadd.f32 %v267, %v261
        %v269 = vadd.f32 %v268, %v262
        %v270 = vadd.f32 %v269, %v263
        %v271 = vadd.f32 %v264, %v270
        %272 = vst [vmem:[#allocation2] sm:$0xff] %v271
        // Predicated region
        $region33: #{tpu_custom_call.1} parent=27 // pred_check
          %p273 = pneg %p170
        $region34: #{tpu_custom_call.1} parent=27 // pred_check_branch
          %275 = sbr.rel (%p273) target = $region36
        $region35: #{tpu_custom_call.1} parent=27 // pred_region
          %v276 = vld [vmem:[#allocation2] sm:$0xff]
          %v277 = vrot.slane %v276, 4
          %v278 = vadd.f32 %v276, %v277
          %v279 = vrot.slane %v278, 2
          %v280 = vadd.f32 %v278, %v279
          %v281 = vrot.slane %v280, 1
          %v282 = vadd.f32 %v280, %v281
          %v283 = vmul.f32 %v282, 0.020408163
          %284 = vst [vmem:[%s158] sm:$0x1] %v283
        $region36: #{tpu_custom_call.1} parent=27 // pred_fallthru
          _
        %s285 = sand.u32 %s85, 1
        %s286 = scalar_lea.sflag [#allocation4], %s285
        %s287 = sand.u32 %s85, 1
        %s288 = scalar_lea.vmem [#allocation3], %s287
        // Predicated region
        $region37: #{tpu_custom_call.1} parent=27 // pred_check
          %p289 = pneg %p95
        $region38: #{tpu_custom_call.1} parent=27 // pred_check_branch
          %291 = sbr.rel (%p289) target = $region40
        $region39: #{tpu_custom_call.1} parent=27 // pred_region
          %293 = vsyncadd %s286, 0
          %s294 = scalar_lea.hbm %s2, %s20
          %s296 = sshll.u32 %s288, 4
          %s297 = int_to_ptr.vmem [resolvable:$true] %s296
          %s298 = sshll.u32 %s294, 4
          %s299 = int_to_ptr.hbm [resolvable:$true] %s298
          %301 = dma.vmem_to_hbm [thread:$0]  %s297, 16, %s299, %s286
        $region40: #{tpu_custom_call.1} parent=27 // pred_fallthru
          _
      $region28: #{tpu_custom_call.1} parent=5 // pred_fallthru
        _
      %p302 = scmp.le.s32.totalorder 2, %s11
      // Predicated region
      $region41: #{tpu_custom_call.1} parent=5 // pred_check
        %p303 = pneg %p302
      $region42: #{tpu_custom_call.1} parent=5 // pred_check_branch
        %305 = sbr.rel (%p303) target = $region44
      $region43: #{tpu_custom_call.1} parent=5 // pred_region
        %s306 = ssub.s32 %s11, 2
        // Predicated region
        $region45: #{tpu_custom_call.1} parent=43 // pred_check
          %p307 = pneg %p101
        $region46: #{tpu_custom_call.1} parent=43 // pred_check_branch
          %309 = sbr.rel (%p307) target = $region48
        $region47: #{tpu_custom_call.1} parent=43 // pred_region
          %s310 = sand.u32 %s86, 1
          %s311 = scalar_lea.sflag [#allocation4], %s310
          %s312 = sand.u32 %s86, 1
          %s313 = scalar_lea.vmem [#allocation3], %s312
          %315 = dma.done %s311, 16
        $region48: #{tpu_custom_call.1} parent=43 // pred_fallthru
          _
      $region44: #{tpu_custom_call.1} parent=5 // pred_fallthru
        _
    $region6: #{tpu_custom_call.1} parent=1 // loop_footer
      %s15 = sadd.s32 1, %s11
    $region7: #{tpu_custom_call.1} parent=1 // loop_footer_branch
      %10 = sbr.rel target = $region3
    $region8: #{tpu_custom_call.1} parent=1 // loop_exit
      _
    %316 = vsyncpa [#allocation4], 1
    %s317 = scalar_lea.sflag [#allocation4], 1
    %318 = vsyncpa %s317, 1

</llo_original>
